<compile_context>
chip_gen: v5e
topology: v5e:2x2
jax: 0.10.0
libtpu: 0.0.40
codegen_flags: <defaults>
</compile_context>

<pallas_src>
import functools

import jax
import jax.numpy as jnp
from jax.experimental import pallas as pl
from jax.experimental.pallas import tpu as pltpu

HIDDEN = 256
LANE = 128
SUBLANE = 8


def _round_up(n, m):
    return ((n + m - 1) // m) * m


def actor_kernel(x_ref, w1_ref, b1_ref, w2_ref, b2_ref, w3_ref, b3_ref, o_ref,
                 *, max_action):
    # Layer 1: Linear + ReLU  (MXU matmul, f32 accumulation; bias/activations in f32)
    h1 = jnp.dot(x_ref[...], w1_ref[...], preferred_element_type=jnp.float32)
    h1 = jnp.maximum(h1 + b1_ref[...], 0.0)
    # Layer 2: Linear + ReLU
    h2 = jnp.dot(h1.astype(w2_ref.dtype), w2_ref[...],
                 preferred_element_type=jnp.float32)
    h2 = jnp.maximum(h2 + b2_ref[...], 0.0)
    # Layer 3: Linear + tanh, scaled by max_action (tanh on EUP, f32)
    h3 = jnp.dot(h2.astype(w3_ref.dtype), w3_ref[...],
                 preferred_element_type=jnp.float32)
    o_ref[...] = (max_action * jnp.tanh(h3 + b3_ref[...])).astype(o_ref.dtype)


def actor_forward(state, params, max_action, *, batch_tile=None, use_bf16=False):
    """state: (B, state_dim) f32 -> (B, action_dim) f32."""
    w1, b1, w2, b2, w3, b3 = params
    B, state_dim = state.shape
    hidden = w1.shape[1]
    action_dim = w3.shape[1]

    # Lane-pad the feature dims; sublane/tile-pad the batch dim.
    k_pad = _round_up(state_dim, LANE)
    n_pad = _round_up(action_dim, LANE)
    if batch_tile is None:
        # Big tiles amortize the ~0.35us/grid-step overhead and fill the MXU;
        # cap at 256 rows so large B still yields >=2 parallel steps (v7x megacore).
        batch_tile = min(_round_up(B, SUBLANE), 256)
    b_pad = _round_up(max(B, SUBLANE), batch_tile)

    compute_dtype = jnp.bfloat16 if use_bf16 else jnp.float32

    # Zero-padding rows of w1 / cols of w3,b3 leaves the math unchanged; padded
    # batch rows and action columns are sliced off below.
    x_p = jnp.zeros((b_pad, k_pad), compute_dtype).at[:B, :state_dim].set(
        state.astype(compute_dtype))
    w1_p = jnp.zeros((k_pad, hidden), compute_dtype).at[:state_dim, :].set(
        w1.astype(compute_dtype))
    w2_p = w2.astype(compute_dtype)
    w3_p = jnp.zeros((hidden, n_pad), compute_dtype).at[:, :action_dim].set(
        w3.astype(compute_dtype))
    b1_p = b1.astype(jnp.float32)
    b2_p = b2.astype(jnp.float32)
    b3_p = jnp.zeros((1, n_pad), jnp.float32).at[:, :action_dim].set(
        b3.astype(jnp.float32))

    grid = (b_pad // batch_tile,)

    op_bytes = jnp.dtype(compute_dtype).itemsize
    flops = 2 * b_pad * (k_pad * hidden + hidden * hidden + hidden * n_pad)
    transcendentals = b_pad * n_pad
    bytes_accessed = (
        (x_p.size + w1_p.size + w2_p.size + w3_p.size) * op_bytes
        + (b1_p.size + b2_p.size + b3_p.size) * 4
        + b_pad * n_pad * 4)

    kernel = functools.partial(actor_kernel, max_action=float(max_action))

    out = pl.pallas_call(
        kernel,
        out_shape=jax.ShapeDtypeStruct((b_pad, n_pad), jnp.float32),
        grid_spec=pltpu.PrefetchScalarGridSpec(
            num_scalar_prefetch=0,
            grid=grid,
            in_specs=[
                # per-batch-tile, lane-dense slice of the (padded) input
                pl.BlockSpec((batch_tile, k_pad), lambda i: (i, 0)),
                # weights / biases: full blocks, resident across the grid
                pl.BlockSpec((k_pad, hidden), lambda i: (0, 0)),
                pl.BlockSpec((1, hidden), lambda i: (0, 0)),
                pl.BlockSpec((hidden, hidden), lambda i: (0, 0)),
                pl.BlockSpec((1, hidden), lambda i: (0, 0)),
                pl.BlockSpec((hidden, n_pad), lambda i: (0, 0)),
                pl.BlockSpec((1, n_pad), lambda i: (0, 0)),
            ],
            out_specs=pl.BlockSpec((batch_tile, n_pad), lambda i: (i, 0)),
        ),
        compiler_params=pltpu.CompilerParams(
            dimension_semantics=("parallel",)),
        cost_estimate=pl.CostEstimate(
            flops=flops,
            transcendentals=transcendentals,
            bytes_accessed=bytes_accessed),
    )(x_p, w1_p, b1_p, w2_p, b2_p, w3_p, b3_p)

    return out[:B, :action_dim]


def init_params(key, state_dim, action_dim):
    """Deterministic init matching nn.Linear shapes (weights stored transposed: (in, out))."""
    k1, k2, k3, k4, k5, k6 = jax.random.split(key, 6)

    def uinit(k, shape, fan_in):
        bound = 1.0 / jnp.sqrt(fan_in)
        return jax.random.uniform(k, shape, jnp.float32, -bound, bound)

    w1 = uinit(k1, (state_dim, HIDDEN), state_dim)
    b1 = uinit(k2, (1, HIDDEN), state_dim)
    w2 = uinit(k3, (HIDDEN, HIDDEN), HIDDEN)
    b2 = uinit(k4, (1, HIDDEN), HIDDEN)
    w3 = uinit(k5, (HIDDEN, action_dim), HIDDEN)
    b3 = uinit(k6, (1, action_dim), HIDDEN)
    return (w1, b1, w2, b2, w3, b3)


def actor_reference(state, params, max_action):
    w1, b1, w2, b2, w3, b3 = params
    a = jnp.maximum(state @ w1 + b1, 0.0)
    a = jnp.maximum(a @ w2 + b2, 0.0)
    return max_action * jnp.tanh(a @ w3 + b3)


if __name__ == "__main__":
    key = jax.random.PRNGKey(0)
    k_params, k_state, k_big = jax.random.split(key, 3)

    batch, state_dim, action_dim = 16, 32, 8
    max_action = 2.0

    params = init_params(k_params, state_dim, action_dim)

    # Small batch: grid collapses to a single step.
    state = jax.random.normal(k_state, (batch, state_dim), jnp.float32)
    out = jax.block_until_ready(actor_forward(state, params, max_action))
    ref = actor_reference(state, params, max_action)
    assert out.shape == (batch, action_dim)
    assert jnp.allclose(out, ref, atol=1e-5, rtol=1e-5)

    # Larger batch: multi-step parallel grid (256-row tiles), f32 path.
    big_batch = 512
    state_big = jax.random.normal(k_big, (big_batch, state_dim), jnp.float32)
    out_big = jax.block_until_ready(actor_forward(state_big, params, max_action))
    ref_big = actor_reference(state_big, params, max_action)
    assert out_big.shape == (big_batch, action_dim)
    assert jnp.allclose(out_big, ref_big, atol=1e-4, rtol=1e-4)

    # bf16-operand path (v6e/v7x MXU throughput); looser tolerance by design.
    out_bf16 = jax.block_until_ready(
        actor_forward(state_big, params, max_action, use_bf16=True))
    assert jnp.allclose(out_bf16, ref_big, atol=2e-2, rtol=2e-2)

    print("KERNEL_OK")
</pallas_src>

<mosaic_0001>
module attributes {stable_mosaic.version = 11 : i64} {
  func.func @actor_kernel(%arg0: i32, %arg1: memref<16x128xf32, #tpu.memory_space<vmem>>, %arg2: memref<128x256xf32, #tpu.memory_space<vmem>>, %arg3: memref<1x256xf32, #tpu.memory_space<vmem>>, %arg4: memref<256x256xf32, #tpu.memory_space<vmem>>, %arg5: memref<1x256xf32, #tpu.memory_space<vmem>>, %arg6: memref<256x128xf32, #tpu.memory_space<vmem>>, %arg7: memref<1x128xf32, #tpu.memory_space<vmem>>, %arg8: memref<16x128xf32, #tpu.memory_space<vmem>>) attributes {dimension_semantics = [#tpu.dimension_semantics<parallel>], iteration_bounds = array<i64: 1>, scalar_prefetch = 0 : i64, scratch_operands = 0 : i64, tpu.core_type = #tpu.core_type<tc>, window_params = [{transform_indices = @transform_0, window_bounds = array<i64: 16, 128>}, {pipeline_mode = #tpu.pipeline_mode<synchronous>, transform_indices = @transform_1, window_bounds = array<i64: 128, 256>}, {pipeline_mode = #tpu.pipeline_mode<synchronous>, transform_indices = @transform_2, window_bounds = array<i64: 1, 256>}, {pipeline_mode = #tpu.pipeline_mode<synchronous>, transform_indices = @transform_3, window_bounds = array<i64: 256, 256>}, {pipeline_mode = #tpu.pipeline_mode<synchronous>, transform_indices = @transform_4, window_bounds = array<i64: 1, 256>}, {pipeline_mode = #tpu.pipeline_mode<synchronous>, transform_indices = @transform_5, window_bounds = array<i64: 256, 128>}, {pipeline_mode = #tpu.pipeline_mode<synchronous>, transform_indices = @transform_6, window_bounds = array<i64: 1, 128>}, {transform_indices = @transform_7, window_bounds = array<i64: 16, 128>}]} {
    %c0 = arith.constant 0 : index
    %c0_0 = arith.constant 0 : index
    %0 = vector.load %arg1[%c0, %c0_0] : memref<16x128xf32, #tpu.memory_space<vmem>>, vector<16x128xf32>
    %c0_1 = arith.constant 0 : index
    %c0_2 = arith.constant 0 : index
    %1 = vector.load %arg2[%c0_1, %c0_2] : memref<128x256xf32, #tpu.memory_space<vmem>>, vector<128x256xf32>
    %cst = arith.constant dense<0.000000e+00> : vector<16x256xf32>
    %2 = tpu.matmul %0, %1, %cst {dimension_numbers = #tpu.dot_dimension_numbers<[1], [0], [0], [1], [0, 0, 1, 1], [], []>} : vector<16x128xf32>, vector<128x256xf32>, vector<16x256xf32> -> vector<16x256xf32>
    %c0_3 = arith.constant 0 : index
    %c0_4 = arith.constant 0 : index
    %3 = vector.load %arg3[%c0_3, %c0_4] : memref<1x256xf32, #tpu.memory_space<vmem>>, vector<1x256xf32>
    %4 = vector.broadcast %3 : vector<1x256xf32> to vector<16x256xf32>
    %5 = arith.addf %2, %4 : vector<16x256xf32>
    %cst_5 = arith.constant 0.000000e+00 : f32
    %6 = vector.broadcast %cst_5 : f32 to vector<16x256xf32>
    %7 = arith.maximumf %5, %6 : vector<16x256xf32>
    %c0_6 = arith.constant 0 : index
    %c0_7 = arith.constant 0 : index
    %8 = vector.load %arg4[%c0_6, %c0_7] : memref<256x256xf32, #tpu.memory_space<vmem>>, vector<256x256xf32>
    %cst_8 = arith.constant dense<0.000000e+00> : vector<16x256xf32>
    %9 = tpu.matmul %7, %8, %cst_8 {dimension_numbers = #tpu.dot_dimension_numbers<[1], [0], [0], [1], [0, 0, 1, 1], [], []>} : vector<16x256xf32>, vector<256x256xf32>, vector<16x256xf32> -> vector<16x256xf32>
    %c0_9 = arith.constant 0 : index
    %c0_10 = arith.constant 0 : index
    %10 = vector.load %arg5[%c0_9, %c0_10] : memref<1x256xf32, #tpu.memory_space<vmem>>, vector<1x256xf32>
    %11 = vector.broadcast %10 : vector<1x256xf32> to vector<16x256xf32>
    %12 = arith.addf %9, %11 : vector<16x256xf32>
    %cst_11 = arith.constant 0.000000e+00 : f32
    %13 = vector.broadcast %cst_11 : f32 to vector<16x256xf32>
    %14 = arith.maximumf %12, %13 : vector<16x256xf32>
    %c0_12 = arith.constant 0 : index
    %c0_13 = arith.constant 0 : index
    %15 = vector.load %arg6[%c0_12, %c0_13] : memref<256x128xf32, #tpu.memory_space<vmem>>, vector<256x128xf32>
    %cst_14 = arith.constant dense<0.000000e+00> : vector<16x128xf32>
    %16 = tpu.matmul %14, %15, %cst_14 {dimension_numbers = #tpu.dot_dimension_numbers<[1], [0], [0], [1], [0, 0, 1, 1], [], []>} : vector<16x256xf32>, vector<256x128xf32>, vector<16x128xf32> -> vector<16x128xf32>
    %c0_15 = arith.constant 0 : index
    %c0_16 = arith.constant 0 : index
    %17 = vector.load %arg7[%c0_15, %c0_16] : memref<1x128xf32, #tpu.memory_space<vmem>>, vector<1x128xf32>
    %18 = vector.broadcast %17 : vector<1x128xf32> to vector<16x128xf32>
    %19 = arith.addf %16, %18 : vector<16x128xf32>
    %20 = math.tanh %19 : vector<16x128xf32>
    %cst_17 = arith.constant 2.000000e+00 : f32
    %21 = vector.broadcast %cst_17 : f32 to vector<16x128xf32>
    %22 = arith.mulf %21, %20 : vector<16x128xf32>
    %c0_18 = arith.constant 0 : index
    %c0_19 = arith.constant 0 : index
    %23 = vector.load %arg8[%c0_18, %c0_19] : memref<16x128xf32, #tpu.memory_space<vmem>>, vector<16x128xf32>
    tpu.vector_store %arg8[%c0_18, %c0_19], %22 {strides = array<i32>} : memref<16x128xf32, #tpu.memory_space<vmem>>, vector<16x128xf32>,
    return
  }
  func.func @transform_0(%arg0: i32) -> (i32, i32) {
    %c0_i32 = arith.constant 0 : i32
    %c0_i32_0 = arith.constant 0 : i32
    return %arg0, %c0_i32 : i32, i32
  }
  func.func @transform_1(%arg0: i32) -> (i32, i32) {
    %c0_i32 = arith.constant 0 : i32
    %c0_i32_0 = arith.constant 0 : i32
    %c0_i32_1 = arith.constant 0 : i32
    return %c0_i32, %c0_i32_0 : i32, i32
  }
  func.func @transform_2(%arg0: i32) -> (i32, i32) {
    %c0_i32 = arith.constant 0 : i32
    %c0_i32_0 = arith.constant 0 : i32
    %c0_i32_1 = arith.constant 0 : i32
    return %c0_i32, %c0_i32_0 : i32, i32
  }
  func.func @transform_3(%arg0: i32) -> (i32, i32) {
    %c0_i32 = arith.constant 0 : i32
    %c0_i32_0 = arith.constant 0 : i32
    %c0_i32_1 = arith.constant 0 : i32
    return %c0_i32, %c0_i32_0 : i32, i32
  }
  func.func @transform_4(%arg0: i32) -> (i32, i32) {
    %c0_i32 = arith.constant 0 : i32
    %c0_i32_0 = arith.constant 0 : i32
    %c0_i32_1 = arith.constant 0 : i32
    return %c0_i32, %c0_i32_0 : i32, i32
  }
  func.func @transform_5(%arg0: i32) -> (i32, i32) {
    %c0_i32 = arith.constant 0 : i32
    %c0_i32_0 = arith.constant 0 : i32
    %c0_i32_1 = arith.constant 0 : i32
    return %c0_i32, %c0_i32_0 : i32, i32
  }
  func.func @transform_6(%arg0: i32) -> (i32, i32) {
    %c0_i32 = arith.constant 0 : i32
    %c0_i32_0 = arith.constant 0 : i32
    %c0_i32_1 = arith.constant 0 : i32
    return %c0_i32, %c0_i32_0 : i32, i32
  }
  func.func @transform_7(%arg0: i32) -> (i32, i32) {
    %c0_i32 = arith.constant 0 : i32
    %c0_i32_0 = arith.constant 0 : i32
    return %arg0, %c0_i32 : i32, i32
  }
}

</mosaic_0001>

<llo_original>
// kernel: tpu_custom_call.1
$region0: #{tpu_custom_call.1}
  #allocation0 [shape = 'u32[]', space=smem, size = 0x4, offset = 0x4, fixed_abs, tag = 'smem constant byte address 0x4 - core index']
  #allocation1 [shape = 'u32[72,128]{1,0:T(1,128)}', space=vmem, size = 0x9000, scoped, tag = 'internal scratch']
  %s0 = inlined_call_operand.hbm [shape: f32[16,128], index: 0, kind: input, shape index: {}]
  %s1 = inlined_call_operand.hbm [shape: f32[128,256], index: 1, kind: input, shape index: {}]
  %s2 = inlined_call_operand.hbm [shape: f32[1,256], index: 2, kind: input, shape index: {}]
  %s3 = inlined_call_operand.hbm [shape: f32[256,256], index: 3, kind: input, shape index: {}]
  %s4 = inlined_call_operand.vmem [shape: f32[1,256], index: 4, kind: input, shape index: {}]
  %s5 = inlined_call_operand.hbm [shape: f32[256,128], index: 5, kind: input, shape index: {}]
  %s6 = inlined_call_operand.vmem [shape: f32[1,128], index: 6, kind: input, shape index: {}]
  %s7 = inlined_call_operand.hbm [shape: f32[16,128], index: 7, kind: output, shape index: {}]
  %s8 = sld [smem:[#allocation0]]
  $region58: #{tpu_custom_call.1} parent=0
    _
  %s10 = ssub.s32 1, %s8
  %s11 = scalar_select 0, %s10, %s8
  $region1: #{tpu_custom_call.1} parent=0
    #allocation2 [shape = 'u8[8192]{0}', space=vmem, size = 0x2000, scoped, tag = 'input window, operand 0, single buffered']
    #allocation3 [shape = 's32[1]{0}', space=sflag, size = 0x4, scoped, tag = 'scoped memory for tpu_custom_call.1']
    #allocation4 [shape = 's32[1]{0}', space=sflag, size = 0x4, scoped, tag = 'scoped memory for tpu_custom_call.1']
    #allocation5 [shape = 'u8[131072]{0}', space=vmem, size = 0x20000, scoped, tag = 'input window, operand 1, single buffered']
    #allocation6 [shape = 's32[1]{0}', space=sflag, size = 0x4, scoped, tag = 'scoped memory for tpu_custom_call.1']
    #allocation7 [shape = 'u8[1024]{0}', space=vmem, size = 0x400, scoped, tag = 'input window, operand 2, single buffered']
    #allocation8 [shape = 'u8[262144]{0}', space=vmem, size = 0x40000, scoped, tag = 'input window, operand 3, single buffered']
    #allocation9 [shape = 's32[1]{0}', space=sflag, size = 0x4, scoped, tag = 'scoped memory for tpu_custom_call.1']
    #allocation10 [shape = 'u8[131072]{0}', space=vmem, size = 0x20000, scoped, tag = 'input window, operand 5, single buffered']
    #allocation11 [shape = 'u8[8192]{0}', space=vmem, size = 0x2000, scoped, tag = 'output window, operand 0, single buffered']
    %12 = vsyncpa [#allocation3], 0
    %13 = vsyncpa [#allocation6], 0
    %14 = vsyncpa [#allocation9], 0
    %15 = vsyncpa [#allocation4], 0
    // Predicated region
    $region2: #{tpu_custom_call.1} parent=1 // pred_check
      _
    $region3: #{tpu_custom_call.1} parent=1 // pred_check_branch
      %17 = sbr.rel (0) target = $region5
    $region4: #{tpu_custom_call.1} parent=1 // pred_region
      %19 = vsyncadd [#allocation3], 0
      %s20 = sshll.u32 %s0, 4
      %s21 = int_to_ptr.hbm [resolvable:$true] %s20
      %s22 = sshll.u32 [#allocation2], 4
      %s23 = int_to_ptr.vmem [resolvable:$true] %s22
      %28 = dma.hbm_to_vmem [thread:$0]  %s21, 256, %s23, [#allocation3], 128, 128, 8
    $region5: #{tpu_custom_call.1} parent=1 // pred_fallthru
      _
    // Predicated region
    $region6: #{tpu_custom_call.1} parent=1 // pred_check
      _
    $region7: #{tpu_custom_call.1} parent=1 // pred_check_branch
      %30 = sbr.rel (0) target = $region9
    $region8: #{tpu_custom_call.1} parent=1 // pred_region
      %32 = vsyncadd [#allocation6], 0
      %s33 = sshll.u32 %s1, 4
      %s34 = int_to_ptr.hbm [resolvable:$true] %s33
      %s35 = sshll.u32 [#allocation5], 4
      %s36 = int_to_ptr.vmem [resolvable:$true] %s35
      %41 = dma.hbm_to_vmem [thread:$0]  %s34, 4096, %s36, [#allocation6], 256, 256, 16
    $region9: #{tpu_custom_call.1} parent=1 // pred_fallthru
      _
    // Predicated region
    $region10: #{tpu_custom_call.1} parent=1 // pred_check
      _
    $region11: #{tpu_custom_call.1} parent=1 // pred_check_branch
      %43 = sbr.rel (0) target = $region13
    $region12: #{tpu_custom_call.1} parent=1 // pred_region
      %45 = vsyncadd [#allocation6], 0
      %s47 = sshll.u32 %s2, 4
      %s48 = int_to_ptr.hbm [resolvable:$true] %s47
      %s49 = sshll.u32 [#allocation7], 4
      %s50 = int_to_ptr.vmem [resolvable:$true] %s49
      %52 = dma.hbm_to_vmem [thread:$0]  %s48, 32, %s50, [#allocation6]
    $region13: #{tpu_custom_call.1} parent=1 // pred_fallthru
      _
    // Predicated region
    $region14: #{tpu_custom_call.1} parent=1 // pred_check
      _
    $region15: #{tpu_custom_call.1} parent=1 // pred_check_branch
      %54 = sbr.rel (0) target = $region17
    $region16: #{tpu_custom_call.1} parent=1 // pred_region
      %56 = vsyncadd [#allocation9], 0
      %s57 = sshll.u32 %s3, 4
      %s58 = int_to_ptr.hbm [resolvable:$true] %s57
      %s59 = sshll.u32 [#allocation8], 4
      %s60 = int_to_ptr.vmem [resolvable:$true] %s59
      %65 = dma.hbm_to_vmem [thread:$0]  %s58, 8192, %s60, [#allocation9], 256, 256, 16
    $region17: #{tpu_custom_call.1} parent=1 // pred_fallthru
      _
    // Predicated region
    $region18: #{tpu_custom_call.1} parent=1 // pred_check
      _
    $region19: #{tpu_custom_call.1} parent=1 // pred_check_branch
      %67 = sbr.rel (0) target = $region21
    $region20: #{tpu_custom_call.1} parent=1 // pred_region
      _
    $region21: #{tpu_custom_call.1} parent=1 // pred_fallthru
      _
    // Predicated region
    $region22: #{tpu_custom_call.1} parent=1 // pred_check
      _
    $region23: #{tpu_custom_call.1} parent=1 // pred_check_branch
      %69 = sbr.rel (0) target = $region25
    $region24: #{tpu_custom_call.1} parent=1 // pred_region
      %71 = vsyncadd [#allocation9], 0
      %s72 = sshll.u32 %s5, 4
      %s73 = int_to_ptr.hbm [resolvable:$true] %s72
      %s74 = sshll.u32 [#allocation10], 4
      %s75 = int_to_ptr.vmem [resolvable:$true] %s74
      %80 = dma.hbm_to_vmem [thread:$0]  %s73, 4096, %s75, [#allocation9], 128, 128, 8
    $region25: #{tpu_custom_call.1} parent=1 // pred_fallthru
      _
    // Predicated region
    $region26: #{tpu_custom_call.1} parent=1 // pred_check
      _
    $region27: #{tpu_custom_call.1} parent=1 // pred_check_branch
      %82 = sbr.rel (0) target = $region29
    $region28: #{tpu_custom_call.1} parent=1 // pred_region
      _
    $region29: #{tpu_custom_call.1} parent=1 // pred_fallthru
      _
    // Predicated region
    $region30: #{tpu_custom_call.1} parent=1 // pred_check
      _
    $region31: #{tpu_custom_call.1} parent=1 // pred_check_branch
      %84 = sbr.rel (0) target = $region33
    $region32: #{tpu_custom_call.1} parent=1 // pred_region
      %86 = dma.done [#allocation3], 256
    $region33: #{tpu_custom_call.1} parent=1 // pred_fallthru
      _
    // Predicated region
    $region34: #{tpu_custom_call.1} parent=1 // pred_check
      _
    $region35: #{tpu_custom_call.1} parent=1 // pred_check_branch
      %88 = sbr.rel (0) target = $region37
    $region36: #{tpu_custom_call.1} parent=1 // pred_region
      %90 = dma.done [#allocation6], 4096
    $region37: #{tpu_custom_call.1} parent=1 // pred_fallthru
      _
    // Predicated region
    $region38: #{tpu_custom_call.1} parent=1 // pred_check
      _
    $region39: #{tpu_custom_call.1} parent=1 // pred_check_branch
      %92 = sbr.rel (0) target = $region41
    $region40: #{tpu_custom_call.1} parent=1 // pred_region
      %94 = dma.done [#allocation6], 32
    $region41: #{tpu_custom_call.1} parent=1 // pred_fallthru
      _
    // Predicated region
    $region42: #{tpu_custom_call.1} parent=1 // pred_check
      _
    $region43: #{tpu_custom_call.1} parent=1 // pred_check_branch
      %96 = sbr.rel (0) target = $region45
    $region44: #{tpu_custom_call.1} parent=1 // pred_region
      %98 = dma.done [#allocation9], 8192
    $region45: #{tpu_custom_call.1} parent=1 // pred_fallthru
      _
    // Predicated region
    $region46: #{tpu_custom_call.1} parent=1 // pred_check
      _
    $region47: #{tpu_custom_call.1} parent=1 // pred_check_branch
      %100 = sbr.rel (0) target = $region49
    $region48: #{tpu_custom_call.1} parent=1 // pred_region
      %102 = dma.done [#allocation9], 4096
    $region49: #{tpu_custom_call.1} parent=1 // pred_fallthru
      _
    %v103 = vld [vmem:[#allocation2] sm:$0xff]
    %v104 = vld [vmem:[#allocation2 + $0x8] sm:$0xff]
    %v105 = vld [vmem:[#allocation5] sm:$0xff]
    %v106 = vld [vmem:[#allocation5 + $0x8] sm:$0xff]
    %v107 = vld [vmem:[#allocation5 + $0x10] sm:$0xff]
    %v108 = vld [vmem:[#allocation5 + $0x18] sm:$0xff]
    %v109 = vld [vmem:[#allocation5 + $0x20] sm:$0xff]
    %v110 = vld [vmem:[#allocation5 + $0x28] sm:$0xff]
    %v111 = vld [vmem:[#allocation5 + $0x30] sm:$0xff]
    %v112 = vld [vmem:[#allocation5 + $0x38] sm:$0xff]
    %v113 = vld [vmem:[#allocation5 + $0x40] sm:$0xff]
    %v114 = vld [vmem:[#allocation5 + $0x48] sm:$0xff]
    %v115 = vld [vmem:[#allocation5 + $0x50] sm:$0xff]
    %v116 = vld [vmem:[#allocation5 + $0x58] sm:$0xff]
    %v117 = vld [vmem:[#allocation5 + $0x60] sm:$0xff]
    %v118 = vld [vmem:[#allocation5 + $0x68] sm:$0xff]
    %v119 = vld [vmem:[#allocation5 + $0x70] sm:$0xff]
    %v120 = vld [vmem:[#allocation5 + $0x78] sm:$0xff]
    %v121 = vld [vmem:[#allocation5 + $0x80] sm:$0xff]
    %v122 = vld [vmem:[#allocation5 + $0x88] sm:$0xff]
    %v123 = vld [vmem:[#allocation5 + $0x90] sm:$0xff]
    %v124 = vld [vmem:[#allocation5 + $0x98] sm:$0xff]
    %v125 = vld [vmem:[#allocation5 + $0xa0] sm:$0xff]
    %v126 = vld [vmem:[#allocation5 + $0xa8] sm:$0xff]
    %v127 = vld [vmem:[#allocation5 + $0xb0] sm:$0xff]
    %v128 = vld [vmem:[#allocation5 + $0xb8] sm:$0xff]
    %v129 = vld [vmem:[#allocation5 + $0xc0] sm:$0xff]
    %v130 = vld [vmem:[#allocation5 + $0xc8] sm:$0xff]
    %v131 = vld [vmem:[#allocation5 + $0xd0] sm:$0xff]
    %v132 = vld [vmem:[#allocation5 + $0xd8] sm:$0xff]
    %v133 = vld [vmem:[#allocation5 + $0xe0] sm:$0xff]
    %v134 = vld [vmem:[#allocation5 + $0xe8] sm:$0xff]
    %v135 = vld [vmem:[#allocation5 + $0xf0] sm:$0xff]
    %v136 = vld [vmem:[#allocation5 + $0xf8] sm:$0xff]
    %v137 = vld [vmem:[#allocation7] sm:$0x3]
    %v139 = vperm.slane %v137, 0
    %v140 = vperm.slane %v137, 1
    %143 = vmatpush.msra.mxu0 %v135
    %144 = vmatpush.msra.mxu0 %v133
    %145 = vmatpush.msra.mxu0 %v131
    %146 = vmatpush.msra.mxu0 %v129
    %147 = vmatpush.msra.mxu0 %v127
    %148 = vmatpush.msra.mxu0 %v125
    %149 = vmatpush.msra.mxu0 %v123
    %150 = vmatpush.msra.mxu0 %v121
    %151 = vmatpush.msra.mxu0 %v119
    %152 = vmatpush.msra.mxu0 %v117
    %153 = vmatpush.msra.mxu0 %v115
    %154 = vmatpush.msra.mxu0 %v113
    %155 = vmatpush.msra.mxu0 %v111
    %156 = vmatpush.msra.mxu0 %v109
    %157 = vmatpush.msra.mxu0 %v107
    %158 = vmatpush.msra.mxu0 %v105
    %159 = vmatmul.f32.gmra.mxu0 %v103
    %v160 = vpop.f32.mrf.mxu0
    %v161 = vadd.f32 %v139, %v160
    %162 = vmatmul.f32.gmra.mxu0 %v104
    %v163 = vpop.f32.mrf.mxu0
    %v164 = vadd.f32 %v139, %v163
    %165 = vdwg.mxu0
    %166 = vmatpush.msra.mxu0 %v136
    %167 = vmatpush.msra.mxu0 %v134
    %168 = vmatpush.msra.mxu0 %v132
    %169 = vmatpush.msra.mxu0 %v130
    %170 = vmatpush.msra.mxu0 %v128
    %171 = vmatpush.msra.mxu0 %v126
    %172 = vmatpush.msra.mxu0 %v124
    %173 = vmatpush.msra.mxu0 %v122
    %174 = vmatpush.msra.mxu0 %v120
    %175 = vmatpush.msra.mxu0 %v118
    %176 = vmatpush.msra.mxu0 %v116
    %177 = vmatpush.msra.mxu0 %v114
    %178 = vmatpush.msra.mxu0 %v112
    %179 = vmatpush.msra.mxu0 %v110
    %180 = vmatpush.msra.mxu0 %v108
    %181 = vmatpush.msra.mxu0 %v106
    %182 = vmatmul.f32.gmra.mxu0 %v103
    %v183 = vpop.f32.mrf.mxu0
    %v184 = vadd.f32 %v140, %v183
    %185 = vmatmul.f32.gmra.mxu0 %v104
    %v186 = vpop.f32.mrf.mxu0
    %v187 = vadd.f32 %v140, %v186
    %188 = vdwg.mxu0
    %v189 = vmax.f32 %v161, 0.0
    %v190 = vmax.f32 %v184, 0.0
    %v191 = vmax.f32 %v164, 0.0
    %v192 = vmax.f32 %v187, 0.0
    %v193 = vld [vmem:[#allocation8] sm:$0xff]
    %v194 = vld [vmem:[#allocation8 + $0x8] sm:$0xff]
    %v195 = vld [vmem:[#allocation8 + $0x10] sm:$0xff]
    %v196 = vld [vmem:[#allocation8 + $0x18] sm:$0xff]
    %v197 = vld [vmem:[#allocation8 + $0x20] sm:$0xff]
    %v198 = vld [vmem:[#allocation8 + $0x28] sm:$0xff]
    %v199 = vld [vmem:[#allocation8 + $0x30] sm:$0xff]
    %v200 = vld [vmem:[#allocation8 + $0x38] sm:$0xff]
    %v201 = vld [vmem:[#allocation8 + $0x40] sm:$0xff]
    %v202 = vld [vmem:[#allocation8 + $0x48] sm:$0xff]
    %v203 = vld [vmem:[#allocation8 + $0x50] sm:$0xff]
    %v204 = vld [vmem:[#allocation8 + $0x58] sm:$0xff]
    %v205 = vld [vmem:[#allocation8 + $0x60] sm:$0xff]
    %v206 = vld [vmem:[#allocation8 + $0x68] sm:$0xff]
    %v207 = vld [vmem:[#allocation8 + $0x70] sm:$0xff]
    %v208 = vld [vmem:[#allocation8 + $0x78] sm:$0xff]
    %v209 = vld [vmem:[#allocation8 + $0x80] sm:$0xff]
    %v210 = vld [vmem:[#allocation8 + $0x88] sm:$0xff]
    %v211 = vld [vmem:[#allocation8 + $0x90] sm:$0xff]
    %v212 = vld [vmem:[#allocation8 + $0x98] sm:$0xff]
    %v213 = vld [vmem:[#allocation8 + $0xa0] sm:$0xff]
    %v214 = vld [vmem:[#allocation8 + $0xa8] sm:$0xff]
    %v215 = vld [vmem:[#allocation8 + $0xb0] sm:$0xff]
    %v216 = vld [vmem:[#allocation8 + $0xb8] sm:$0xff]
    %v217 = vld [vmem:[#allocation8 + $0xc0] sm:$0xff]
    %v218 = vld [vmem:[#allocation8 + $0xc8] sm:$0xff]
    %v219 = vld [vmem:[#allocation8 + $0xd0] sm:$0xff]
    %v220 = vld [vmem:[#allocation8 + $0xd8] sm:$0xff]
    %v221 = vld [vmem:[#allocation8 + $0xe0] sm:$0xff]
    %v222 = vld [vmem:[#allocation8 + $0xe8] sm:$0xff]
    %v223 = vld [vmem:[#allocation8 + $0xf0] sm:$0xff]
    %v224 = vld [vmem:[#allocation8 + $0xf8] sm:$0xff]
    %v225 = vld [vmem:[#allocation8 + $0x100] sm:$0xff]
    %v226 = vld [vmem:[#allocation8 + $0x108] sm:$0xff]
    %v227 = vld [vmem:[#allocation8 + $0x110] sm:$0xff]
    %v228 = vld [vmem:[#allocation8 + $0x118] sm:$0xff]
    %v229 = vld [vmem:[#allocation8 + $0x120] sm:$0xff]
    %v230 = vld [vmem:[#allocation8 + $0x128] sm:$0xff]
    %v231 = vld [vmem:[#allocation8 + $0x130] sm:$0xff]
    %v232 = vld [vmem:[#allocation8 + $0x138] sm:$0xff]
    %v233 = vld [vmem:[#allocation8 + $0x140] sm:$0xff]
    %v234 = vld [vmem:[#allocation8 + $0x148] sm:$0xff]
    %v235 = vld [vmem:[#allocation8 + $0x150] sm:$0xff]
    %v236 = vld [vmem:[#allocation8 + $0x158] sm:$0xff]
    %v237 = vld [vmem:[#allocation8 + $0x160] sm:$0xff]
    %v238 = vld [vmem:[#allocation8 + $0x168] sm:$0xff]
    %v239 = vld [vmem:[#allocation8 + $0x170] sm:$0xff]
    %v240 = vld [vmem:[#allocation8 + $0x178] sm:$0xff]
    %v241 = vld [vmem:[#allocation8 + $0x180] sm:$0xff]
    %v242 = vld [vmem:[#allocation8 + $0x188] sm:$0xff]
    %v243 = vld [vmem:[#allocation8 + $0x190] sm:$0xff]
    %v244 = vld [vmem:[#allocation8 + $0x198] sm:$0xff]
    %v245 = vld [vmem:[#allocation8 + $0x1a0] sm:$0xff]
    %v246 = vld [vmem:[#allocation8 + $0x1a8] sm:$0xff]
    %v247 = vld [vmem:[#allocation8 + $0x1b0] sm:$0xff]
    %v248 = vld [vmem:[#allocation8 + $0x1b8] sm:$0xff]
    %v249 = vld [vmem:[#allocation8 + $0x1c0] sm:$0xff]
    %v250 = vld [vmem:[#allocation8 + $0x1c8] sm:$0xff]
    %v251 = vld [vmem:[#allocation8 + $0x1d0] sm:$0xff]
    %v252 = vld [vmem:[#allocation8 + $0x1d8] sm:$0xff]
    %v253 = vld [vmem:[#allocation8 + $0x1e0] sm:$0xff]
    %v254 = vld [vmem:[#allocation8 + $0x1e8] sm:$0xff]
    %v255 = vld [vmem:[#allocation8 + $0x1f0] sm:$0xff]
    %v256 = vld [vmem:[#allocation8 + $0x1f8] sm:$0xff]
    %v257 = vld [vmem:[%s4] sm:$0x3]
    %v259 = vperm.slane %v257, 0
    %v260 = vperm.slane %v257, 1
    %263 = vmatpush.msra.mxu0 %v223
    %264 = vmatpush.msra.mxu0 %v221
    %265 = vmatpush.msra.mxu0 %v219
    %266 = vmatpush.msra.mxu0 %v217
    %267 = vmatpush.msra.mxu0 %v215
    %268 = vmatpush.msra.mxu0 %v213
    %269 = vmatpush.msra.mxu0 %v211
    %270 = vmatpush.msra.mxu0 %v209
    %271 = vmatpush.msra.mxu0 %v207
    %272 = vmatpush.msra.mxu0 %v205
    %273 = vmatpush.msra.mxu0 %v203
    %274 = vmatpush.msra.mxu0 %v201
    %275 = vmatpush.msra.mxu0 %v199
    %276 = vmatpush.msra.mxu0 %v197
    %277 = vmatpush.msra.mxu0 %v195
    %278 = vmatpush.msra.mxu0 %v193
    %279 = vmatmul.f32.gmra.mxu0 %v189
    %v280 = vpop.f32.mrf.mxu0
    %v281 = vadd.f32 %v259, %v280
    %282 = vmatmul.f32.gmra.mxu0 %v191
    %v283 = vpop.f32.mrf.mxu0
    %v284 = vadd.f32 %v259, %v283
    %285 = vdwg.mxu0
    %286 = vmatpush.msra.mxu0 %v255
    %287 = vmatpush.msra.mxu0 %v253
    %288 = vmatpush.msra.mxu0 %v251
    %289 = vmatpush.msra.mxu0 %v249
    %290 = vmatpush.msra.mxu0 %v247
    %291 = vmatpush.msra.mxu0 %v245
    %292 = vmatpush.msra.mxu0 %v243
    %293 = vmatpush.msra.mxu0 %v241
    %294 = vmatpush.msra.mxu0 %v239
    %295 = vmatpush.msra.mxu0 %v237
    %296 = vmatpush.msra.mxu0 %v235
    %297 = vmatpush.msra.mxu0 %v233
    %298 = vmatpush.msra.mxu0 %v231
    %299 = vmatpush.msra.mxu0 %v229
    %300 = vmatpush.msra.mxu0 %v227
    %301 = vmatpush.msra.mxu0 %v225
    %302 = vmatmul.f32.gmra.mxu0 %v190
    %v303 = vpop.f32.mrf.mxu0
    %v304 = vadd.f32 %v281, %v303
    %305 = vmatmul.f32.gmra.mxu0 %v192
    %v306 = vpop.f32.mrf.mxu0
    %v307 = vadd.f32 %v284, %v306
    %308 = vdwg.mxu0
    %309 = vmatpush.msra.mxu0 %v224
    %310 = vmatpush.msra.mxu0 %v222
    %311 = vmatpush.msra.mxu0 %v220
    %312 = vmatpush.msra.mxu0 %v218
    %313 = vmatpush.msra.mxu0 %v216
    %314 = vmatpush.msra.mxu0 %v214
    %315 = vmatpush.msra.mxu0 %v212
    %316 = vmatpush.msra.mxu0 %v210
    %317 = vmatpush.msra.mxu0 %v208
    %318 = vmatpush.msra.mxu0 %v206
    %319 = vmatpush.msra.mxu0 %v204
    %320 = vmatpush.msra.mxu0 %v202
    %321 = vmatpush.msra.mxu0 %v200
    %322 = vmatpush.msra.mxu0 %v198
    %323 = vmatpush.msra.mxu0 %v196
    %324 = vmatpush.msra.mxu0 %v194
    %325 = vmatmul.f32.gmra.mxu0 %v189
    %v326 = vpop.f32.mrf.mxu0
    %v327 = vadd.f32 %v260, %v326
    %328 = vmatmul.f32.gmra.mxu0 %v191
    %v329 = vpop.f32.mrf.mxu0
    %v330 = vadd.f32 %v260, %v329
    %331 = vdwg.mxu0
    %332 = vmatpush.msra.mxu0 %v256
    %333 = vmatpush.msra.mxu0 %v254
    %334 = vmatpush.msra.mxu0 %v252
    %335 = vmatpush.msra.mxu0 %v250
    %336 = vmatpush.msra.mxu0 %v248
    %337 = vmatpush.msra.mxu0 %v246
    %338 = vmatpush.msra.mxu0 %v244
    %339 = vmatpush.msra.mxu0 %v242
    %340 = vmatpush.msra.mxu0 %v240
    %341 = vmatpush.msra.mxu0 %v238
    %342 = vmatpush.msra.mxu0 %v236
    %343 = vmatpush.msra.mxu0 %v234
    %344 = vmatpush.msra.mxu0 %v232
    %345 = vmatpush.msra.mxu0 %v230
    %346 = vmatpush.msra.mxu0 %v228
    %347 = vmatpush.msra.mxu0 %v226
    %348 = vmatmul.f32.gmra.mxu0 %v190
    %v349 = vpop.f32.mrf.mxu0
    %v350 = vadd.f32 %v327, %v349
    %351 = vmatmul.f32.gmra.mxu0 %v192
    %v352 = vpop.f32.mrf.mxu0
    %v353 = vadd.f32 %v330, %v352
    %354 = vdwg.mxu0
    %v355 = vmax.f32 %v304, 0.0
    %v356 = vmax.f32 %v350, 0.0
    %v357 = vmax.f32 %v307, 0.0
    %v358 = vmax.f32 %v353, 0.0
    %v359 = vld [vmem:[#allocation10] sm:$0xff]
    %v360 = vld [vmem:[#allocation10 + $0x8] sm:$0xff]
    %v361 = vld [vmem:[#allocation10 + $0x10] sm:$0xff]
    %v362 = vld [vmem:[#allocation10 + $0x18] sm:$0xff]
    %v363 = vld [vmem:[#allocation10 + $0x20] sm:$0xff]
    %v364 = vld [vmem:[#allocation10 + $0x28] sm:$0xff]
    %v365 = vld [vmem:[#allocation10 + $0x30] sm:$0xff]
    %v366 = vld [vmem:[#allocation10 + $0x38] sm:$0xff]
    %v367 = vld [vmem:[#allocation10 + $0x40] sm:$0xff]
    %v368 = vld [vmem:[#allocation10 + $0x48] sm:$0xff]
    %v369 = vld [vmem:[#allocation10 + $0x50] sm:$0xff]
    %v370 = vld [vmem:[#allocation10 + $0x58] sm:$0xff]
    %v371 = vld [vmem:[#allocation10 + $0x60] sm:$0xff]
    %v372 = vld [vmem:[#allocation10 + $0x68] sm:$0xff]
    %v373 = vld [vmem:[#allocation10 + $0x70] sm:$0xff]
    %v374 = vld [vmem:[#allocation10 + $0x78] sm:$0xff]
    %v375 = vld [vmem:[#allocation10 + $0x80] sm:$0xff]
    %v376 = vld [vmem:[#allocation10 + $0x88] sm:$0xff]
    %v377 = vld [vmem:[#allocation10 + $0x90] sm:$0xff]
    %v378 = vld [vmem:[#allocation10 + $0x98] sm:$0xff]
    %v379 = vld [vmem:[#allocation10 + $0xa0] sm:$0xff]
    %v380 = vld [vmem:[#allocation10 + $0xa8] sm:$0xff]
    %v381 = vld [vmem:[#allocation10 + $0xb0] sm:$0xff]
    %v382 = vld [vmem:[#allocation10 + $0xb8] sm:$0xff]
    %v383 = vld [vmem:[#allocation10 + $0xc0] sm:$0xff]
    %v384 = vld [vmem:[#allocation10 + $0xc8] sm:$0xff]
    %v385 = vld [vmem:[#allocation10 + $0xd0] sm:$0xff]
    %v386 = vld [vmem:[#allocation10 + $0xd8] sm:$0xff]
    %v387 = vld [vmem:[#allocation10 + $0xe0] sm:$0xff]
    %v388 = vld [vmem:[#allocation10 + $0xe8] sm:$0xff]
    %v389 = vld [vmem:[#allocation10 + $0xf0] sm:$0xff]
    %v390 = vld [vmem:[#allocation10 + $0xf8] sm:$0xff]
    %v391 = vld [vmem:[%s6] sm:$0x1]
    %v393 = vperm.slane %v391, 0
    %395 = vmatpush.msra.mxu0 %v374
    %396 = vmatpush.msra.mxu0 %v373
    %397 = vmatpush.msra.mxu0 %v372
    %398 = vmatpush.msra.mxu0 %v371
    %399 = vmatpush.msra.mxu0 %v370
    %400 = vmatpush.msra.mxu0 %v369
    %401 = vmatpush.msra.mxu0 %v368
    %402 = vmatpush.msra.mxu0 %v367
    %403 = vmatpush.msra.mxu0 %v366
    %404 = vmatpush.msra.mxu0 %v365
    %405 = vmatpush.msra.mxu0 %v364
    %406 = vmatpush.msra.mxu0 %v363
    %407 = vmatpush.msra.mxu0 %v362
    %408 = vmatpush.msra.mxu0 %v361
    %409 = vmatpush.msra.mxu0 %v360
    %410 = vmatpush.msra.mxu0 %v359
    %411 = vmatmul.f32.gmra.mxu0 %v355
    %v412 = vpop.f32.mrf.mxu0
    %v413 = vadd.f32 %v393, %v412
    %414 = vmatmul.f32.gmra.mxu0 %v357
    %v415 = vpop.f32.mrf.mxu0
    %v416 = vadd.f32 %v393, %v415
    %417 = vdwg.mxu0
    %418 = vmatpush.msra.mxu0 %v390
    %419 = vmatpush.msra.mxu0 %v389
    %420 = vmatpush.msra.mxu0 %v388
    %421 = vmatpush.msra.mxu0 %v387
    %422 = vmatpush.msra.mxu0 %v386
    %423 = vmatpush.msra.mxu0 %v385
    %424 = vmatpush.msra.mxu0 %v384
    %425 = vmatpush.msra.mxu0 %v383
    %426 = vmatpush.msra.mxu0 %v382
    %427 = vmatpush.msra.mxu0 %v381
    %428 = vmatpush.msra.mxu0 %v380
    %429 = vmatpush.msra.mxu0 %v379
    %430 = vmatpush.msra.mxu0 %v378
    %431 = vmatpush.msra.mxu0 %v377
    %432 = vmatpush.msra.mxu0 %v376
    %433 = vmatpush.msra.mxu0 %v375
    %434 = vmatmul.f32.gmra.mxu0 %v356
    %v435 = vpop.f32.mrf.mxu0
    %v436 = vadd.f32 %v413, %v435
    %437 = vmatmul.f32.gmra.mxu0 %v358
    %v438 = vpop.f32.mrf.mxu0
    %v439 = vadd.f32 %v416, %v438
    %440 = vdwg.mxu0
    %v441 = vtanh.pop %v436
    %v442 = vtanh.pop %v439
    %v443 = vmul.f32 %v441, 2.0
    %v444 = vmul.f32 %v442, 2.0
    %445 = vst [vmem:[#allocation11] sm:$0xff] %v443
    %446 = vst [vmem:[#allocation11 + $0x8] sm:$0xff] %v444
    // Predicated region
    $region50: #{tpu_custom_call.1} parent=1 // pred_check
      _
    $region51: #{tpu_custom_call.1} parent=1 // pred_check_branch
      %448 = sbr.rel (0) target = $region53
    $region52: #{tpu_custom_call.1} parent=1 // pred_region
      %450 = vsyncadd [#allocation4], 0
      %s451 = sshll.u32 [#allocation11], 4
      %s452 = int_to_ptr.vmem [resolvable:$true] %s451
      %s453 = sshll.u32 %s7, 4
      %s454 = int_to_ptr.hbm [resolvable:$true] %s453
      %459 = dma.vmem_to_hbm [thread:$0]  %s452, 256, %s454, [#allocation4], 128, 128, 8
    $region53: #{tpu_custom_call.1} parent=1 // pred_fallthru
      _
    // Predicated region
    $region54: #{tpu_custom_call.1} parent=1 // pred_check
      _
    $region55: #{tpu_custom_call.1} parent=1 // pred_check_branch
      %461 = sbr.rel (0) target = $region57
    $region56: #{tpu_custom_call.1} parent=1 // pred_region
      %463 = dma.done [#allocation4], 256
    $region57: #{tpu_custom_call.1} parent=1 // pred_fallthru
      _
    %464 = vsyncpa [#allocation3], 1
    %465 = vsyncpa [#allocation6], 1
    %466 = vsyncpa [#allocation9], 1
    %467 = vsyncpa [#allocation4], 1

</llo_original>
